<compile_context>
chip_gen: v6e
topology: v6e:2x2x1
jax: 0.10.0
libtpu: 0.0.40
codegen_flags: <defaults>
</compile_context>

<pallas_src>
import jax
import jax.numpy as jnp
from jax.experimental import pallas as pl
from jax.experimental.pallas import tpu as pltpu


def _linear_vpu_kernel(xt_ref, w_ref, b_ref, ot_ref):
    # Per-block shapes: xt (1, TB), w (N, 1), b (N, 1), ot (N, TB).
    # Pure VPU broadcast multiply-add; no MXU round-trip, no accumulator
    # scratch, no reduction grid axis (K == 1 means there is nothing to
    # pipeline).
    ot_ref[...] = (w_ref[...] * xt_ref[...] + b_ref[...]).astype(ot_ref.dtype)


def pallas_linear(x, weight, bias, *, tb=2048):
    """Torch-style Linear(in=1, out=N):  y = x @ weight.T + bias.

    x:      (B, 1)  f32
    weight: (N, 1)  f32  (torch layout: (out_features, in_features))
    bias:   (N,)    f32
    returns (B, N)  f32
    """
    B, kin = x.shape
    N, kin_w = weight.shape
    assert kin == 1 and kin_w == 1

    # Lane-dense layout: batch on the 128-lane axis.
    xt = x.T                      # (1, B)
    b2 = bias.reshape(N, 1)       # (N, 1)

    if B <= tb:
        # Single invocation, no grid, everything VMEM-resident.
        yt = pl.pallas_call(
            _linear_vpu_kernel,
            out_shape=jax.ShapeDtypeStruct((N, B), x.dtype),
            in_specs=[
                pl.BlockSpec(memory_space=pltpu.MemorySpace.VMEM),
                pl.BlockSpec(memory_space=pltpu.MemorySpace.VMEM),
                pl.BlockSpec(memory_space=pltpu.MemorySpace.VMEM),
            ],
            out_specs=pl.BlockSpec(memory_space=pltpu.MemorySpace.VMEM),
        )(xt, weight, b2)
    else:
        # Batch-tiled, mem-bound sweep.  TB must be a multiple of 128 so the
        # (N, TB) output tile satisfies the lane constraint and stores are
        # unmasked.  W and b use constant index_maps -> stay resident.
        assert tb % 128 == 0
        yt = pl.pallas_call(
            _linear_vpu_kernel,
            out_shape=jax.ShapeDtypeStruct((N, B), x.dtype),
            grid=(pl.cdiv(B, tb),),
            in_specs=[
                pl.BlockSpec((1, tb), lambda i: (0, i)),
                pl.BlockSpec((N, 1), lambda i: (0, 0)),
                pl.BlockSpec((N, 1), lambda i: (0, 0)),
            ],
            out_specs=pl.BlockSpec((N, tb), lambda i: (0, i)),
            compiler_params=pltpu.CompilerParams(
                dimension_semantics=("parallel",)
            ),
        )(xt, weight, b2)

    return yt.T  # (B, N)


if __name__ == "__main__":
    in_features, out_features = 1, 10

    key = jax.random.PRNGKey(0)
    kx, kw, kb, kx2 = jax.random.split(key, 4)

    # Deterministic init mimicking torch.nn.Linear default:
    # U(-1/sqrt(fan_in), 1/sqrt(fan_in)) with fan_in = 1.
    bound = 1.0 / (in_features ** 0.5)
    weight = jax.random.uniform(
        kw, (out_features, in_features), jnp.float32, -bound, bound
    )  # torch layout (out, in)
    bias = jax.random.uniform(kb, (out_features,), jnp.float32, -bound, bound)

    # --- small-batch path (no grid) ---
    batch = 8
    x = jax.random.normal(kx, (batch, in_features), jnp.float32)
    y = jax.block_until_ready(pallas_linear(x, weight, bias))
    y_ref = x @ weight.T + bias
    assert y.shape == (batch, out_features)
    assert jnp.allclose(y, y_ref, atol=1e-5, rtol=1e-5)

    # --- batch-tiled path (grid over batch, partial last tile) ---
    batch2 = 600
    x2 = jax.random.normal(kx2, (batch2, in_features), jnp.float32)
    y2 = jax.block_until_ready(pallas_linear(x2, weight, bias, tb=256))
    y2_ref = x2 @ weight.T + bias
    assert y2.shape == (batch2, out_features)
    assert jnp.allclose(y2, y2_ref, atol=1e-5, rtol=1e-5)

    print("KERNEL_OK")
</pallas_src>

<mosaic_0001>
module attributes {stable_mosaic.version = 11 : i64} {
  func.func @_linear_vpu_kernel(%arg0: memref<1x8xf32, #tpu.memory_space<vmem>>, %arg1: memref<10x1xf32, #tpu.memory_space<vmem>>, %arg2: memref<10x1xf32, #tpu.memory_space<vmem>>, %arg3: memref<10x8xf32, #tpu.memory_space<vmem>>) attributes {dimension_semantics = [], scalar_prefetch = 0 : i64, scratch_operands = 0 : i64, tpu.core_type = #tpu.core_type<tc>} {
    %c0 = arith.constant 0 : index
    %c0_0 = arith.constant 0 : index
    %0 = vector.load %arg1[%c0, %c0_0] : memref<10x1xf32, #tpu.memory_space<vmem>>, vector<10x1xf32>
    %c0_1 = arith.constant 0 : index
    %c0_2 = arith.constant 0 : index
    %1 = vector.load %arg0[%c0_1, %c0_2] : memref<1x8xf32, #tpu.memory_space<vmem>>, vector<1x8xf32>
    %2 = vector.broadcast %0 : vector<10x1xf32> to vector<10x8xf32>
    %3 = vector.broadcast %1 : vector<1x8xf32> to vector<10x8xf32>
    %4 = arith.mulf %2, %3 : vector<10x8xf32>
    %c0_3 = arith.constant 0 : index
    %c0_4 = arith.constant 0 : index
    %5 = vector.load %arg2[%c0_3, %c0_4] : memref<10x1xf32, #tpu.memory_space<vmem>>, vector<10x1xf32>
    %6 = vector.broadcast %5 : vector<10x1xf32> to vector<10x8xf32>
    %7 = arith.addf %4, %6 : vector<10x8xf32>
    %c0_5 = arith.constant 0 : index
    %c0_6 = arith.constant 0 : index
    %8 = vector.load %arg3[%c0_5, %c0_6] : memref<10x8xf32, #tpu.memory_space<vmem>>, vector<10x8xf32>
    tpu.vector_store %arg3[%c0_5, %c0_6], %7 {strides = array<i32>} : memref<10x8xf32, #tpu.memory_space<vmem>>, vector<10x8xf32>,
    return
  }
}

</mosaic_0001>

<llo_original>
// kernel: tpu_custom_call.1
$region0: #{tpu_custom_call.1}
  #allocation0 [shape = 'u32[]', space=smem, size = 0x4, offset = 0x4, fixed_abs, tag = 'smem constant byte address 0x4 - core index']
  #allocation1 [shape = 'u32[144,128]{1,0:T(1,128)}', space=vmem, size = 0x12000, scoped, tag = 'internal scratch']
  %s0 = inlined_call_operand.vmem [shape: f32[1,8], index: 0, kind: input, shape index: {}]
  %s1 = inlined_call_operand.vmem [shape: f32[10,1], index: 1, kind: input, shape index: {}]
  %s2 = inlined_call_operand.vmem [shape: f32[10,1], index: 2, kind: input, shape index: {}]
  %s3 = inlined_call_operand.vmem [shape: f32[10,8], index: 3, kind: output, shape index: {}]
  %s4 = sld [smem:[#allocation0]]
  $region22: #{tpu_custom_call.1} parent=0
    _
  %s6 = ssub.s32 1, %s4
  %s7 = scalar_select 0, %s6, %s4
  // Predicated region
  $region2: #{tpu_custom_call.1} parent=0 // pred_check
    _
  $region3: #{tpu_custom_call.1} parent=0 // pred_check_branch
    %9 = sbr.rel (0) target = $region5
  $region4: #{tpu_custom_call.1} parent=0 // pred_region
    _
  $region5: #{tpu_custom_call.1} parent=0 // pred_fallthru
    _
  // Predicated region
  $region6: #{tpu_custom_call.1} parent=0 // pred_check
    _
  $region7: #{tpu_custom_call.1} parent=0 // pred_check_branch
    %11 = sbr.rel (0) target = $region9
  $region8: #{tpu_custom_call.1} parent=0 // pred_region
    _
  $region9: #{tpu_custom_call.1} parent=0 // pred_fallthru
    _
  // Predicated region
  $region10: #{tpu_custom_call.1} parent=0 // pred_check
    _
  $region11: #{tpu_custom_call.1} parent=0 // pred_check_branch
    %13 = sbr.rel (0) target = $region13
  $region12: #{tpu_custom_call.1} parent=0 // pred_region
    _
  $region13: #{tpu_custom_call.1} parent=0 // pred_fallthru
    _
  %v14 = vld [vmem:[%s1] sm:$0xff]
  %v15 = vld [vmem:[%s1 + $0x8] sm:$0x3]
  %v16 = vld [vmem:[%s0] sm:$0x1]
  %18 = vset.pattern.permute.xlu0 0
  %19 = vperm.xlu0 %18, %v14
  %v20 = vpop.permute.xlu0 %19
  %23 = vset.pattern.permute.xlu0 0
  %24 = vperm.xlu0 %23, %v15
  %v25 = vpop.permute.xlu0 %24
  %v28 = vlaneseq
  %v29 = vshrl.u32 %v28, 7
  %v30 = vsub.s32 0, %v29
  %v31 = vrot.slane %v16, %v30
  %v33 = vmul.f32 %v20, %v31
  %v34 = vmul.f32 %v25, %v31
  %v35 = vld [vmem:[%s2] sm:$0xff]
  %v36 = vld [vmem:[%s2 + $0x8] sm:$0x3]
  %38 = vset.pattern.permute.xlu0 0
  %39 = vperm.xlu0 %38, %v35
  %v40 = vpop.permute.xlu0 %39
  %43 = vset.pattern.permute.xlu0 0
  %44 = vperm.xlu0 %43, %v36
  %v45 = vpop.permute.xlu0 %44
  %v47 = vadd.f32 %v33, %v40
  %v48 = vadd.f32 %v34, %v45
  %vm49 = vcmask 64512
  %50 = vst.msk [vmem:[%s3] sm:$0xff] %vm49, %v47
  %vm51 = vcmask 58368
  %52 = vst.msk [vmem:[%s3 + $0x8] sm:$0x3] %vm51, %v48
  // Predicated region
  $region14: #{tpu_custom_call.1} parent=0 // pred_check
    _
  $region15: #{tpu_custom_call.1} parent=0 // pred_check_branch
    %54 = sbr.rel (0) target = $region17
  $region16: #{tpu_custom_call.1} parent=0 // pred_region
    _
  $region17: #{tpu_custom_call.1} parent=0 // pred_fallthru
    _
  // Predicated region
  $region18: #{tpu_custom_call.1} parent=0 // pred_check
    _
  $region19: #{tpu_custom_call.1} parent=0 // pred_check_branch
    %56 = sbr.rel (0) target = $region21
  $region20: #{tpu_custom_call.1} parent=0 // pred_region
    _
  $region21: #{tpu_custom_call.1} parent=0 // pred_fallthru
    _

</llo_original>
